<compile_context>
chip_gen: v6e
topology: v6e:2x2x1
jax: 0.10.0
libtpu: 0.0.40
codegen_flags: <defaults>
</compile_context>

<pallas_src>
import jax
import jax.numpy as jnp
import numpy as np
from jax.experimental import pallas as pl
from jax.experimental.pallas import tpu as pltpu

# -----------------------------------------------------------------------------
# Model dimensions (synthetic, deterministic init — no checkpoint loading)
# -----------------------------------------------------------------------------
B = 2          # batch of crops
C = 4          # channels
H = 16         # crop height
W = 16         # crop width -> sequence length
F = C * H      # per-timestep feature dim = 64
HID = 32       # logical hidden units (zero-padded to 128 for the MXU/lanes)
VOCAB = 128    # vocab size (already lane-aligned)


def recognition_kernel(x_ref, w1_ref, b1_ref, w2_ref, b2_ref, idx_ref, conf_ref):
    """Whole batch (or one batch chunk) per grid step.

    x_ref:    (Bc, W, F)       raw time-major features (normalization folded into w1/b1)
    w1_ref:   (F, HID_PAD)     feature -> hidden (normalization-folded, zero-padded)
    b1_ref:   (1, HID_PAD)
    w2_ref:   (HID_PAD, V)     hidden -> vocab logits (zero-padded rows)
    b2_ref:   (1, V)
    idx_ref:  (Bc, W)  int32   argmax char index per time step
    conf_ref: (Bc, 1)  float32 sequence confidence (min over t of max prob)
    """
    bc, w, f = x_ref.shape

    # Flatten batch*time onto the matmul M axis (collapse of major dims: free).
    x2d = x_ref[...].reshape(bc * w, f)                          # (Bc*W, F)

    # feature -> hidden (MXU) + ReLU   (normalization already folded in)
    h = jnp.dot(x2d, w1_ref[...], preferred_element_type=jnp.float32)
    h = jnp.maximum(h + b1_ref[...], 0.0)                        # (Bc*W, HID_PAD)

    # hidden -> vocab logits (MXU)
    logits2d = jnp.dot(h, w2_ref[...], preferred_element_type=jnp.float32)
    logits2d = logits2d + b2_ref[...]                            # (Bc*W, V)

    logits = logits2d.reshape(bc, w, -1)                         # (Bc, W, V)
    vocab = logits.shape[-1]

    # greedy decode: argmax(softmax) == argmax(logits); lowest-index tie-break
    m = jnp.max(logits, axis=-1, keepdims=True)                  # (Bc, W, 1)
    lane_iota = jax.lax.broadcasted_iota(jnp.int32, logits.shape, 2)
    idx = jnp.min(jnp.where(logits >= m, lane_iota, vocab), axis=-1)   # (Bc, W)
    # NOTE: at W=16 this is a masked (partial-lane) store; at realistic crop
    # widths keep W a multiple of 128 for an unmasked lane-dense slab.
    idx_ref[...] = idx.astype(jnp.int32)

    # confidence: per-step max prob = 1/sum(exp(logits - m)); sequence conf is
    # the min over time  =>  1 / max_t(sum_exp).  (exp on EUP; no probs array.)
    sum_exp = jnp.sum(jnp.exp(logits - m), axis=-1)              # (Bc, W)
    conf_ref[...] = pl.reciprocal(
        jnp.max(sum_exp, axis=-1, keepdims=True), approx=False)  # (Bc, 1)


def recognition_predictor(crops_nchw, mean, std, w1, b1, w2, b2, *, num_chunks=1):
    """crops_nchw: [B, C, H, W] float32 — already resized (pre_processor resize
    is host-side glue).  Returns (char_indices [B, W] int32, conf [B, 1] f32).

    num_chunks: batch-chunk grid size.  1 (default) = single grid step, best on
    v5e/v6e (1 TensorCore).  On v7x use 2 so each TensorCore takes half the crops.
    """
    # TODO(synk): split_wide_crops / remap_preds operate on Python lists of
    # variable-sized numpy crops and string outputs — host-side, not a kernel.
    b, c, h, w = crops_nchw.shape
    f = c * h
    hid = w1.shape[1]
    vocab = w2.shape[1]
    assert b % num_chunks == 0
    bc = b // num_chunks

    # NCHW -> [B, W, C*H]  (time-major features)
    x = jnp.transpose(crops_nchw, (0, 3, 1, 2)).reshape(b, w, f)

    # --- Fold pre-processor normalization into layer 1 (one-time, tiny) -----
    # ((x - mean) * inv_std) @ w1 + b1 == x @ (inv_std[:,None]*w1) + (b1 - (mean*inv_std)@w1)
    mean_f = jnp.repeat(mean, h).astype(jnp.float32)             # (F,)
    inv_std_f = (1.0 / jnp.repeat(std, h)).astype(jnp.float32)   # (F,)
    w1_eff = inv_std_f[:, None] * w1                             # (F, HID)
    b1_eff = b1 - (mean_f * inv_std_f)[None, :] @ w1             # (1, HID)

    # --- Zero-pad hidden dim to a lane-full 128 (exact: padded units are 0) --
    hid_pad = ((hid + 127) // 128) * 128
    w1p = jnp.zeros((f, hid_pad), jnp.float32).at[:, :hid].set(w1_eff)
    b1p = jnp.zeros((1, hid_pad), jnp.float32).at[:, :hid].set(b1_eff)
    w2p = jnp.zeros((hid_pad, vocab), jnp.float32).at[:hid, :].set(w2)
    b2p = b2.astype(jnp.float32)

    # Weight blocks have a constant index across the grid; at real CRNN sizes
    # consider pipeline_mode=pl.Buffered(1) for them (irrelevant at grid=(1,)).
    grid_spec = pltpu.PrefetchScalarGridSpec(
        num_scalar_prefetch=0,
        grid=(num_chunks,),
        in_specs=[
            pl.BlockSpec((bc, w, f), lambda i: (i, 0, 0)),        # x
            pl.BlockSpec((f, hid_pad), lambda i: (0, 0)),         # w1 (folded, padded)
            pl.BlockSpec((1, hid_pad), lambda i: (0, 0)),         # b1
            pl.BlockSpec((hid_pad, vocab), lambda i: (0, 0)),     # w2 (padded)
            pl.BlockSpec((1, vocab), lambda i: (0, 0)),           # b2
        ],
        out_specs=[
            pl.BlockSpec((bc, w), lambda i: (i, 0)),              # indices
            pl.BlockSpec((bc, 1), lambda i: (i, 0)),              # confidence
        ],
    )

    idx, conf = pl.pallas_call(
        recognition_kernel,
        out_shape=(
            jax.ShapeDtypeStruct((b, w), jnp.int32),
            jax.ShapeDtypeStruct((b, 1), jnp.float32),
        ),
        grid_spec=grid_spec,
        compiler_params=pltpu.CompilerParams(
            dimension_semantics=("parallel",)),
    )(x, w1p, b1p, w2p, b2p)
    return idx, conf


def _reference(crops_nchw, mean, std, w1, b1, w2, b2):
    b, c, h, w = crops_nchw.shape
    x = jnp.transpose(crops_nchw, (0, 3, 1, 2)).reshape(b, w, c * h)
    mean_f = jnp.repeat(mean, h).reshape(1, 1, c * h)
    std_f = jnp.repeat(std, h).reshape(1, 1, c * h)
    xn = (x - mean_f) / std_f
    hdn = jnp.maximum(jnp.einsum("bwf,fh->bwh", xn, w1) + b1, 0.0)
    logits = jnp.einsum("bwh,hv->bwv", hdn, w2) + b2
    probs = jax.nn.softmax(logits, axis=-1)
    idx = jnp.argmax(probs, axis=-1).astype(jnp.int32)
    conf = jnp.min(jnp.max(probs, axis=-1), axis=-1, keepdims=True)
    return idx, conf


if __name__ == "__main__":
    key = jax.random.PRNGKey(0)
    k_x, k_w1, k_b1, k_w2, k_b2 = jax.random.split(key, 5)

    crops = jax.random.uniform(k_x, (B, C, H, W), dtype=jnp.float32)
    mean = jnp.array([0.694, 0.695, 0.693, 0.690], dtype=jnp.float32)  # per-channel
    std = jnp.array([0.299, 0.296, 0.301, 0.305], dtype=jnp.float32)

    w1 = jax.random.normal(k_w1, (F, HID), dtype=jnp.float32) * 0.1
    b1 = jax.random.normal(k_b1, (1, HID), dtype=jnp.float32) * 0.01
    w2 = jax.random.normal(k_w2, (HID, VOCAB), dtype=jnp.float32) * 0.1
    b2 = jax.random.normal(k_b2, (1, VOCAB), dtype=jnp.float32) * 0.01

    idx, conf = recognition_predictor(crops, mean, std, w1, b1, w2, b2)
    jax.block_until_ready((idx, conf))

    ref_idx, ref_conf = _reference(crops, mean, std, w1, b1, w2, b2)
    assert np.array_equal(np.asarray(idx), np.asarray(ref_idx)), "argmax mismatch"
    assert np.allclose(np.asarray(conf), np.asarray(ref_conf), atol=1e-5), "conf mismatch"

    print("KERNEL_OK")
</pallas_src>

<mosaic_0001>
module attributes {stable_mosaic.version = 11 : i64} {
  func.func @recognition_kernel(%arg0: i32, %arg1: memref<2x16x64xf32, #tpu.memory_space<vmem>>, %arg2: memref<64x128xf32, #tpu.memory_space<vmem>>, %arg3: memref<1x128xf32, #tpu.memory_space<vmem>>, %arg4: memref<128x128xf32, #tpu.memory_space<vmem>>, %arg5: memref<1x128xf32, #tpu.memory_space<vmem>>, %arg6: memref<2x16xi32, #tpu.memory_space<vmem>>, %arg7: memref<2x1xf32, #tpu.memory_space<vmem>>) attributes {dimension_semantics = [#tpu.dimension_semantics<parallel>], iteration_bounds = array<i64: 1>, scalar_prefetch = 0 : i64, scratch_operands = 0 : i64, tpu.core_type = #tpu.core_type<tc>, window_params = [{transform_indices = @transform_0, window_bounds = array<i64: 2, 16, 64>}, {pipeline_mode = #tpu.pipeline_mode<synchronous>, transform_indices = @transform_1, window_bounds = array<i64: 64, 128>}, {pipeline_mode = #tpu.pipeline_mode<synchronous>, transform_indices = @transform_2, window_bounds = array<i64: 1, 128>}, {pipeline_mode = #tpu.pipeline_mode<synchronous>, transform_indices = @transform_3, window_bounds = array<i64: 128, 128>}, {pipeline_mode = #tpu.pipeline_mode<synchronous>, transform_indices = @transform_4, window_bounds = array<i64: 1, 128>}, {transform_indices = @transform_5, window_bounds = array<i64: 2, 16>}, {transform_indices = @transform_6, window_bounds = array<i64: 2, 1>}]} {
    %c0 = arith.constant 0 : index
    %c0_0 = arith.constant 0 : index
    %c0_1 = arith.constant 0 : index
    %0 = vector.load %arg1[%c0, %c0_0, %c0_1] : memref<2x16x64xf32, #tpu.memory_space<vmem>>, vector<2x16x64xf32>
    %1 = vector.shape_cast %0 : vector<2x16x64xf32> to vector<32x64xf32>
    %c0_2 = arith.constant 0 : index
    %c0_3 = arith.constant 0 : index
    %2 = vector.load %arg2[%c0_2, %c0_3] : memref<64x128xf32, #tpu.memory_space<vmem>>, vector<64x128xf32>
    %cst = arith.constant dense<0.000000e+00> : vector<32x128xf32>
    %3 = tpu.matmul %1, %2, %cst {dimension_numbers = #tpu.dot_dimension_numbers<[1], [0], [0], [1], [0, 0, 1, 1], [], []>} : vector<32x64xf32>, vector<64x128xf32>, vector<32x128xf32> -> vector<32x128xf32>
    %c0_4 = arith.constant 0 : index
    %c0_5 = arith.constant 0 : index
    %4 = vector.load %arg3[%c0_4, %c0_5] : memref<1x128xf32, #tpu.memory_space<vmem>>, vector<1x128xf32>
    %5 = vector.broadcast %4 : vector<1x128xf32> to vector<32x128xf32>
    %6 = arith.addf %3, %5 : vector<32x128xf32>
    %cst_6 = arith.constant 0.000000e+00 : f32
    %7 = vector.broadcast %cst_6 : f32 to vector<32x128xf32>
    %8 = arith.maximumf %6, %7 : vector<32x128xf32>
    %c0_7 = arith.constant 0 : index
    %c0_8 = arith.constant 0 : index
    %9 = vector.load %arg4[%c0_7, %c0_8] : memref<128x128xf32, #tpu.memory_space<vmem>>, vector<128x128xf32>
    %cst_9 = arith.constant dense<0.000000e+00> : vector<32x128xf32>
    %10 = tpu.matmul %8, %9, %cst_9 {dimension_numbers = #tpu.dot_dimension_numbers<[1], [0], [0], [1], [0, 0, 1, 1], [], []>} : vector<32x128xf32>, vector<128x128xf32>, vector<32x128xf32> -> vector<32x128xf32>
    %c0_10 = arith.constant 0 : index
    %c0_11 = arith.constant 0 : index
    %11 = vector.load %arg5[%c0_10, %c0_11] : memref<1x128xf32, #tpu.memory_space<vmem>>, vector<1x128xf32>
    %12 = vector.broadcast %11 : vector<1x128xf32> to vector<32x128xf32>
    %13 = arith.addf %10, %12 : vector<32x128xf32>
    %14 = vector.shape_cast %13 : vector<32x128xf32> to vector<2x16x128xf32>
    %cst_12 = arith.constant dense<0xFF800000> : vector<2x16xf32>
    %15 = vector.multi_reduction <maximumf>, %14, %cst_12 [2] : vector<2x16x128xf32> to vector<2x16xf32>
    %16 = vector.shape_cast %15 : vector<2x16xf32> to vector<2x16x1xf32>
    %17 = tpu.iota {dimensions = array<i32: 2>} : vector<2x16x128xi32>
    %18 = vector.broadcast %16 : vector<2x16x1xf32> to vector<2x16x128xf32>
    %19 = arith.cmpf oge, %14, %18 : vector<2x16x128xf32>
    %c128_i32 = arith.constant 128 : i32
    %20 = vector.broadcast %c128_i32 : i32 to vector<2x16x128xi32>
    %21 = arith.select %19, %17, %20 : vector<2x16x128xi1>, vector<2x16x128xi32>
    %cst_13 = arith.constant dense<2147483647> : vector<2x16xi32>
    %22 = vector.multi_reduction <minsi>, %21, %cst_13 [2] : vector<2x16x128xi32> to vector<2x16xi32>
    %c0_14 = arith.constant 0 : index
    %c0_15 = arith.constant 0 : index
    %23 = vector.load %arg6[%c0_14, %c0_15] : memref<2x16xi32, #tpu.memory_space<vmem>>, vector<2x16xi32>
    tpu.vector_store %arg6[%c0_14, %c0_15], %22 {strides = array<i32>} : memref<2x16xi32, #tpu.memory_space<vmem>>, vector<2x16xi32>,
    %24 = vector.broadcast %16 : vector<2x16x1xf32> to vector<2x16x128xf32>
    %25 = arith.subf %14, %24 : vector<2x16x128xf32>
    %26 = math.exp %25 : vector<2x16x128xf32>
    %cst_16 = arith.constant dense<0.000000e+00> : vector<2x16xf32>
    %27 = vector.multi_reduction <add>, %26, %cst_16 [2] : vector<2x16x128xf32> to vector<2x16xf32>
    %cst_17 = arith.constant dense<0xFF800000> : vector<2xf32>
    %28 = vector.multi_reduction <maximumf>, %27, %cst_17 [1] : vector<2x16xf32> to vector<2xf32>
    %29 = vector.shape_cast %28 : vector<2xf32> to vector<2x1xf32>
    %30 = tpu.reciprocal %29 : vector<2x1xf32> -> vector<2x1xf32>
    %c0_18 = arith.constant 0 : index
    %c0_19 = arith.constant 0 : index
    %31 = vector.load %arg7[%c0_18, %c0_19] : memref<2x1xf32, #tpu.memory_space<vmem>>, vector<2x1xf32>
    tpu.vector_store %arg7[%c0_18, %c0_19], %30 {strides = array<i32>} : memref<2x1xf32, #tpu.memory_space<vmem>>, vector<2x1xf32>,
    return
  }
  func.func @transform_0(%arg0: i32) -> (i32, i32, i32) {
    %c0_i32 = arith.constant 0 : i32
    %c0_i32_0 = arith.constant 0 : i32
    %c0_i32_1 = arith.constant 0 : i32
    return %arg0, %c0_i32, %c0_i32_0 : i32, i32, i32
  }
  func.func @transform_1(%arg0: i32) -> (i32, i32) {
    %c0_i32 = arith.constant 0 : i32
    %c0_i32_0 = arith.constant 0 : i32
    %c0_i32_1 = arith.constant 0 : i32
    return %c0_i32, %c0_i32_0 : i32, i32
  }
  func.func @transform_2(%arg0: i32) -> (i32, i32) {
    %c0_i32 = arith.constant 0 : i32
    %c0_i32_0 = arith.constant 0 : i32
    %c0_i32_1 = arith.constant 0 : i32
    return %c0_i32, %c0_i32_0 : i32, i32
  }
  func.func @transform_3(%arg0: i32) -> (i32, i32) {
    %c0_i32 = arith.constant 0 : i32
    %c0_i32_0 = arith.constant 0 : i32
    %c0_i32_1 = arith.constant 0 : i32
    return %c0_i32, %c0_i32_0 : i32, i32
  }
  func.func @transform_4(%arg0: i32) -> (i32, i32) {
    %c0_i32 = arith.constant 0 : i32
    %c0_i32_0 = arith.constant 0 : i32
    %c0_i32_1 = arith.constant 0 : i32
    return %c0_i32, %c0_i32_0 : i32, i32
  }
  func.func @transform_5(%arg0: i32) -> (i32, i32) {
    %c0_i32 = arith.constant 0 : i32
    %c0_i32_0 = arith.constant 0 : i32
    return %arg0, %c0_i32 : i32, i32
  }
  func.func @transform_6(%arg0: i32) -> (i32, i32) {
    %c0_i32 = arith.constant 0 : i32
    %c0_i32_0 = arith.constant 0 : i32
    return %arg0, %c0_i32 : i32, i32
  }
}

</mosaic_0001>

<llo_original>
// kernel: tpu_custom_call.1
$region0: #{tpu_custom_call.1}
  #allocation0 [shape = 'u32[]', space=smem, size = 0x4, offset = 0x4, fixed_abs, tag = 'smem constant byte address 0x4 - core index']
  #allocation1 [shape = 'u32[144,128]{1,0:T(1,128)}', space=vmem, size = 0x12000, scoped, tag = 'internal scratch']
  %s0 = inlined_call_operand.hbm [shape: f32[2,16,64], index: 0, kind: input, shape index: {}]
  %s1 = inlined_call_operand.hbm [shape: f32[64,128], index: 1, kind: input, shape index: {}]
  %s2 = inlined_call_operand.vmem [shape: f32[1,128], index: 2, kind: input, shape index: {}]
  %s3 = inlined_call_operand.hbm [shape: f32[128,128], index: 3, kind: input, shape index: {}]
  %s4 = inlined_call_operand.vmem [shape: f32[1,128], index: 4, kind: input, shape index: {}]
  %s5 = inlined_call_operand.hbm [shape: s32[2,16], index: 5, kind: output, shape index: {0}]
  %s6 = inlined_call_operand.vmem [shape: f32[2,1], index: 6, kind: output, shape index: {1}]
  %7 = xla_tuple %s5, %s6
  %s8 = sld [smem:[#allocation0]]
  $region50: #{tpu_custom_call.1} parent=0
    _
  %s10 = ssub.s32 1, %s8
  %s11 = scalar_select 0, %s10, %s8
  $region1: #{tpu_custom_call.1} parent=0
    #allocation2 [shape = 'u8[16384]{0}', space=vmem, size = 0x4000, scoped, tag = 'input window, operand 0, single buffered']
    #allocation3 [shape = 's32[1]{0}', space=sflag, size = 0x4, scoped, tag = 'scoped memory for tpu_custom_call.1']
    #allocation4 [shape = 's32[1]{0}', space=sflag, size = 0x4, scoped, tag = 'scoped memory for tpu_custom_call.1']
    #allocation5 [shape = 'u8[32768]{0}', space=vmem, size = 0x8000, scoped, tag = 'input window, operand 1, single buffered']
    #allocation6 [shape = 's32[1]{0}', space=sflag, size = 0x4, scoped, tag = 'scoped memory for tpu_custom_call.1']
    #allocation7 [shape = 'u8[65536]{0}', space=vmem, size = 0x10000, scoped, tag = 'input window, operand 3, single buffered']
    #allocation8 [shape = 'u8[1024]{0}', space=vmem, size = 0x400, scoped, tag = 'output window, operand 0, single buffered']
    %12 = vsyncpa [#allocation3], 0
    %13 = vsyncpa [#allocation6], 0
    %14 = vsyncpa [#allocation4], 0
    // Predicated region
    $region2: #{tpu_custom_call.1} parent=1 // pred_check
      _
    $region3: #{tpu_custom_call.1} parent=1 // pred_check_branch
      %16 = sbr.rel (0) target = $region5
    $region4: #{tpu_custom_call.1} parent=1 // pred_region
      %s18 = ssub.s32 512, 512
      %19 = vsyncadd [#allocation3], %s18
      %s20 = sshll.u32 [#allocation2], 4
      %s21 = int_to_ptr.vmem [resolvable:$true] %s20
      %26 = dma.hbm_to_vmem [thread:$0]  %s0, 512, %s21, [#allocation3], 128, 128, 8
    $region5: #{tpu_custom_call.1} parent=1 // pred_fallthru
      _
    // Predicated region
    $region6: #{tpu_custom_call.1} parent=1 // pred_check
      _
    $region7: #{tpu_custom_call.1} parent=1 // pred_check_branch
      %28 = sbr.rel (0) target = $region9
    $region8: #{tpu_custom_call.1} parent=1 // pred_region
      %s30 = ssub.s32 1024, 1024
      %31 = vsyncadd [#allocation6], %s30
      %s32 = sshll.u32 [#allocation5], 4
      %s33 = int_to_ptr.vmem [resolvable:$true] %s32
      %38 = dma.hbm_to_vmem [thread:$0]  %s1, 1024, %s33, [#allocation6], 128, 128, 8
    $region9: #{tpu_custom_call.1} parent=1 // pred_fallthru
      _
    // Predicated region
    $region10: #{tpu_custom_call.1} parent=1 // pred_check
      _
    $region11: #{tpu_custom_call.1} parent=1 // pred_check_branch
      %40 = sbr.rel (0) target = $region13
    $region12: #{tpu_custom_call.1} parent=1 // pred_region
      _
    $region13: #{tpu_custom_call.1} parent=1 // pred_fallthru
      _
    // Predicated region
    $region14: #{tpu_custom_call.1} parent=1 // pred_check
      _
    $region15: #{tpu_custom_call.1} parent=1 // pred_check_branch
      %42 = sbr.rel (0) target = $region17
    $region16: #{tpu_custom_call.1} parent=1 // pred_region
      %s44 = ssub.s32 2048, 2048
      %45 = vsyncadd [#allocation6], %s44
      %s46 = sshll.u32 [#allocation7], 4
      %s47 = int_to_ptr.vmem [resolvable:$true] %s46
      %52 = dma.hbm_to_vmem [thread:$0]  %s3, 2048, %s47, [#allocation6], 128, 128, 8
    $region17: #{tpu_custom_call.1} parent=1 // pred_fallthru
      _
    // Predicated region
    $region18: #{tpu_custom_call.1} parent=1 // pred_check
      _
    $region19: #{tpu_custom_call.1} parent=1 // pred_check_branch
      %54 = sbr.rel (0) target = $region21
    $region20: #{tpu_custom_call.1} parent=1 // pred_region
      _
    $region21: #{tpu_custom_call.1} parent=1 // pred_fallthru
      _
    // Predicated region
    $region22: #{tpu_custom_call.1} parent=1 // pred_check
      _
    $region23: #{tpu_custom_call.1} parent=1 // pred_check_branch
      %56 = sbr.rel (0) target = $region25
    $region24: #{tpu_custom_call.1} parent=1 // pred_region
      %57 = dma.done [#allocation3], 512
    $region25: #{tpu_custom_call.1} parent=1 // pred_fallthru
      _
    // Predicated region
    $region26: #{tpu_custom_call.1} parent=1 // pred_check
      _
    $region27: #{tpu_custom_call.1} parent=1 // pred_check_branch
      %59 = sbr.rel (0) target = $region29
    $region28: #{tpu_custom_call.1} parent=1 // pred_region
      %60 = dma.done [#allocation6], 1024
    $region29: #{tpu_custom_call.1} parent=1 // pred_fallthru
      _
    // Predicated region
    $region30: #{tpu_custom_call.1} parent=1 // pred_check
      _
    $region31: #{tpu_custom_call.1} parent=1 // pred_check_branch
      %62 = sbr.rel (0) target = $region33
    $region32: #{tpu_custom_call.1} parent=1 // pred_region
      %63 = dma.done [#allocation6], 2048
    $region33: #{tpu_custom_call.1} parent=1 // pred_fallthru
      _
    %v64 = vld [vmem:[#allocation2] sm:$0xff]
    %v65 = vld [vmem:[#allocation2 + $0x8] sm:$0xff]
    %v66 = vld [vmem:[#allocation2 + $0x10] sm:$0xff]
    %v67 = vld [vmem:[#allocation2 + $0x18] sm:$0xff]
    %v68 = vld [vmem:[#allocation5] sm:$0xff]
    %v69 = vld [vmem:[#allocation5 + $0x8] sm:$0xff]
    %v70 = vld [vmem:[#allocation5 + $0x10] sm:$0xff]
    %v71 = vld [vmem:[#allocation5 + $0x18] sm:$0xff]
    %v72 = vld [vmem:[#allocation5 + $0x20] sm:$0xff]
    %v73 = vld [vmem:[#allocation5 + $0x28] sm:$0xff]
    %v74 = vld [vmem:[#allocation5 + $0x30] sm:$0xff]
    %v75 = vld [vmem:[#allocation5 + $0x38] sm:$0xff]
    %v76 = vld [vmem:[%s2] sm:$0x1]
    %v78 = vlaneseq
    %v79 = vshrl.u32 %v78, 7
    %v80 = vsub.s32 0, %v79
    %v81 = vrot.slane %v76, %v80
    %vm83 = vcmask 523264
    %v85 = vsel %vm83, %v64, 0
    %v88 = vsel %vm83, %v65, 0
    %v91 = vsel %vm83, %v66, 0
    %v94 = vsel %vm83, %v67, 0
    %96 = vmatprep.subr.mxu0 0.0
    %97 = vmatpush1.msra.mxu0 0.0
    %98 = vmatprep.subr.mxu0 0.0
    %99 = vmatpush1.msra.mxu0 0.0
    %100 = vmatprep.subr.mxu0 0.0
    %101 = vmatpush1.msra.mxu0 0.0
    %102 = vmatprep.subr.mxu0 0.0
    %103 = vmatpush1.msra.mxu0 0.0
    %104 = vmatprep.subr.mxu0 0.0
    %105 = vmatpush1.msra.mxu0 0.0
    %106 = vmatprep.subr.mxu0 0.0
    %107 = vmatpush1.msra.mxu0 0.0
    %108 = vmatprep.subr.mxu0 0.0
    %109 = vmatpush1.msra.mxu0 0.0
    %110 = vmatprep.subr.mxu0 0.0
    %111 = vmatpush1.msra.mxu0 0.0
    %112 = vmatprep.subr.mxu0 0.0
    %113 = vmatpush1.msra.mxu0 %v75
    %114 = vmatprep.subr.mxu0 0.0
    %115 = vmatpush1.msra.mxu0 %v74
    %116 = vmatprep.subr.mxu0 0.0
    %117 = vmatpush1.msra.mxu0 %v73
    %118 = vmatprep.subr.mxu0 0.0
    %119 = vmatpush1.msra.mxu0 %v72
    %120 = vmatprep.subr.mxu0 0.0
    %121 = vmatpush1.msra.mxu0 %v71
    %122 = vmatprep.subr.mxu0 0.0
    %123 = vmatpush1.msra.mxu0 %v70
    %124 = vmatprep.subr.mxu0 0.0
    %125 = vmatpush1.msra.mxu0 %v69
    %126 = vmatprep.subr.mxu0 0.0
    %127 = vmatpush1.msra.mxu0 %v68
    %128 = vmatprep.subr.mxu0 0.0
    %129 = vmatpush2.msra.mxu0 0.0
    %130 = vmatprep.subr.mxu0 0.0
    %131 = vmatpush2.msra.mxu0 0.0
    %132 = vmatprep.subr.mxu0 0.0
    %133 = vmatpush2.msra.mxu0 0.0
    %134 = vmatprep.subr.mxu0 0.0
    %135 = vmatpush2.msra.mxu0 0.0
    %136 = vmatprep.subr.mxu0 0.0
    %137 = vmatpush2.msra.mxu0 0.0
    %138 = vmatprep.subr.mxu0 0.0
    %139 = vmatpush2.msra.mxu0 0.0
    %140 = vmatprep.subr.mxu0 0.0
    %141 = vmatpush2.msra.mxu0 0.0
    %142 = vmatprep.subr.mxu0 0.0
    %143 = vmatpush2.msra.mxu0 0.0
    %144 = vmatprep.subr.mxu0 0.0
    %145 = vmatpush2.msra.mxu0 0.0
    %146 = vmatprep.subr.mxu0 0.0
    %147 = vmatpush2.msra.mxu0 0.0
    %148 = vmatprep.subr.mxu0 0.0
    %149 = vmatpush2.msra.mxu0 0.0
    %150 = vmatprep.subr.mxu0 0.0
    %151 = vmatpush2.msra.mxu0 0.0
    %152 = vmatprep.subr.mxu0 0.0
    %153 = vmatpush2.msra.mxu0 0.0
    %154 = vmatprep.subr.mxu0 0.0
    %155 = vmatpush2.msra.mxu0 0.0
    %156 = vmatprep.subr.mxu0 0.0
    %157 = vmatpush2.msra.mxu0 0.0
    %158 = vmatprep.subr.mxu0 0.0
    %159 = vmatpush2.msra.mxu0 0.0
    %160 = vmatprep.mubr.f32.mxu0 0.0
    %161 = vmatmul.mubr.f32.gmra.mxu0 %v85
    %v162 = vpop.f32.mrf.mxu0
    %v163 = vadd.f32 %v81, %v162
    %v164 = vpop.f32.mrf.mxu0
    %165 = vmatprep.mubr.f32.mxu0 0.0
    %166 = vmatmul.mubr.f32.gmra.mxu0 %v88
    %v167 = vpop.f32.mrf.mxu0
    %v168 = vadd.f32 %v81, %v167
    %v169 = vpop.f32.mrf.mxu0
    %170 = vmatprep.mubr.f32.mxu0 0.0
    %171 = vmatmul.mubr.f32.gmra.mxu0 %v91
    %v172 = vpop.f32.mrf.mxu0
    %v173 = vadd.f32 %v81, %v172
    %v174 = vpop.f32.mrf.mxu0
    %175 = vmatprep.mubr.f32.mxu0 0.0
    %176 = vmatmul.mubr.f32.gmra.mxu0 %v94
    %v177 = vpop.f32.mrf.mxu0
    %v178 = vadd.f32 %v81, %v177
    %v179 = vpop.f32.mrf.mxu0
    %180 = vdwg.mxu0
    %v181 = vmax.f32 %v163, 0.0
    %v182 = vmax.f32 %v168, 0.0
    %v183 = vmax.f32 %v173, 0.0
    %v184 = vmax.f32 %v178, 0.0
    %v185 = vld [vmem:[#allocation7] sm:$0xff]
    %v186 = vld [vmem:[#allocation7 + $0x8] sm:$0xff]
    %v187 = vld [vmem:[#allocation7 + $0x10] sm:$0xff]
    %v188 = vld [vmem:[#allocation7 + $0x18] sm:$0xff]
    %v189 = vld [vmem:[#allocation7 + $0x20] sm:$0xff]
    %v190 = vld [vmem:[#allocation7 + $0x28] sm:$0xff]
    %v191 = vld [vmem:[#allocation7 + $0x30] sm:$0xff]
    %v192 = vld [vmem:[#allocation7 + $0x38] sm:$0xff]
    %v193 = vld [vmem:[#allocation7 + $0x40] sm:$0xff]
    %v194 = vld [vmem:[#allocation7 + $0x48] sm:$0xff]
    %v195 = vld [vmem:[#allocation7 + $0x50] sm:$0xff]
    %v196 = vld [vmem:[#allocation7 + $0x58] sm:$0xff]
    %v197 = vld [vmem:[#allocation7 + $0x60] sm:$0xff]
    %v198 = vld [vmem:[#allocation7 + $0x68] sm:$0xff]
    %v199 = vld [vmem:[#allocation7 + $0x70] sm:$0xff]
    %v200 = vld [vmem:[#allocation7 + $0x78] sm:$0xff]
    %v201 = vld [vmem:[%s4] sm:$0x1]
    %v203 = vlaneseq
    %v204 = vshrl.u32 %v203, 7
    %v205 = vsub.s32 0, %v204
    %v206 = vrot.slane %v201, %v205
    %208 = vmatprep.subr.mxu0 0.0
    %209 = vmatpush1.msra.mxu0 %v200
    %210 = vmatprep.subr.mxu0 0.0
    %211 = vmatpush1.msra.mxu0 %v199
    %212 = vmatprep.subr.mxu0 0.0
    %213 = vmatpush1.msra.mxu0 %v198
    %214 = vmatprep.subr.mxu0 0.0
    %215 = vmatpush1.msra.mxu0 %v197
    %216 = vmatprep.subr.mxu0 0.0
    %217 = vmatpush1.msra.mxu0 %v196
    %218 = vmatprep.subr.mxu0 0.0
    %219 = vmatpush1.msra.mxu0 %v195
    %220 = vmatprep.subr.mxu0 0.0
    %221 = vmatpush1.msra.mxu0 %v194
    %222 = vmatprep.subr.mxu0 0.0
    %223 = vmatpush1.msra.mxu0 %v193
    %224 = vmatprep.subr.mxu0 0.0
    %225 = vmatpush1.msra.mxu0 %v192
    %226 = vmatprep.subr.mxu0 0.0
    %227 = vmatpush1.msra.mxu0 %v191
    %228 = vmatprep.subr.mxu0 0.0
    %229 = vmatpush1.msra.mxu0 %v190
    %230 = vmatprep.subr.mxu0 0.0
    %231 = vmatpush1.msra.mxu0 %v189
    %232 = vmatprep.subr.mxu0 0.0
    %233 = vmatpush1.msra.mxu0 %v188
    %234 = vmatprep.subr.mxu0 0.0
    %235 = vmatpush1.msra.mxu0 %v187
    %236 = vmatprep.subr.mxu0 0.0
    %237 = vmatpush1.msra.mxu0 %v186
    %238 = vmatprep.subr.mxu0 0.0
    %239 = vmatpush1.msra.mxu0 %v185
    %240 = vmatprep.subr.mxu0 0.0
    %241 = vmatpush2.msra.mxu0 0.0
    %242 = vmatprep.subr.mxu0 0.0
    %243 = vmatpush2.msra.mxu0 0.0
    %244 = vmatprep.subr.mxu0 0.0
    %245 = vmatpush2.msra.mxu0 0.0
    %246 = vmatprep.subr.mxu0 0.0
    %247 = vmatpush2.msra.mxu0 0.0
    %248 = vmatprep.subr.mxu0 0.0
    %249 = vmatpush2.msra.mxu0 0.0
    %250 = vmatprep.subr.mxu0 0.0
    %251 = vmatpush2.msra.mxu0 0.0
    %252 = vmatprep.subr.mxu0 0.0
    %253 = vmatpush2.msra.mxu0 0.0
    %254 = vmatprep.subr.mxu0 0.0
    %255 = vmatpush2.msra.mxu0 0.0
    %256 = vmatprep.subr.mxu0 0.0
    %257 = vmatpush2.msra.mxu0 0.0
    %258 = vmatprep.subr.mxu0 0.0
    %259 = vmatpush2.msra.mxu0 0.0
    %260 = vmatprep.subr.mxu0 0.0
    %261 = vmatpush2.msra.mxu0 0.0
    %262 = vmatprep.subr.mxu0 0.0
    %263 = vmatpush2.msra.mxu0 0.0
    %264 = vmatprep.subr.mxu0 0.0
    %265 = vmatpush2.msra.mxu0 0.0
    %266 = vmatprep.subr.mxu0 0.0
    %267 = vmatpush2.msra.mxu0 0.0
    %268 = vmatprep.subr.mxu0 0.0
    %269 = vmatpush2.msra.mxu0 0.0
    %270 = vmatprep.subr.mxu0 0.0
    %271 = vmatpush2.msra.mxu0 0.0
    %272 = vmatprep.mubr.f32.mxu0 0.0
    %273 = vmatmul.mubr.f32.gmra.mxu0 %v181
    %v274 = vpop.f32.mrf.mxu0
    %v275 = vadd.f32 %v206, %v274
    %v276 = vpop.f32.mrf.mxu0
    %277 = vmatprep.mubr.f32.mxu0 0.0
    %278 = vmatmul.mubr.f32.gmra.mxu0 %v182
    %v279 = vpop.f32.mrf.mxu0
    %v280 = vadd.f32 %v206, %v279
    %v281 = vpop.f32.mrf.mxu0
    %282 = vmatprep.mubr.f32.mxu0 0.0
    %283 = vmatmul.mubr.f32.gmra.mxu0 %v183
    %v284 = vpop.f32.mrf.mxu0
    %v285 = vadd.f32 %v206, %v284
    %v286 = vpop.f32.mrf.mxu0
    %287 = vmatprep.mubr.f32.mxu0 0.0
    %288 = vmatmul.mubr.f32.gmra.mxu0 %v184
    %v289 = vpop.f32.mrf.mxu0
    %v290 = vadd.f32 %v206, %v289
    %v291 = vpop.f32.mrf.mxu0
    %292 = vdwg.mxu0
    %293 = vmax.xlane.f32.xlu0 %v275
    %v294 = vpop.xlane.xlu0 %293
    %295 = vmax.xlane.f32.xlu0 %v280
    %v296 = vpop.xlane.xlu0 %295
    %297 = vmax.xlane.f32.xlu0 %v285
    %v298 = vpop.xlane.xlu0 %297
    %299 = vmax.xlane.f32.xlu0 %v290
    %v300 = vpop.xlane.xlu0 %299
    %v301 = vlaneseq
    %v302 = vand.u32 %v301, 127
    %vm303 = vcmp.ge.f32.partialorder %v275, %v294
    %vm304 = vcmp.ge.f32.partialorder %v280, %v296
    %vm305 = vcmp.ge.f32.partialorder %v285, %v298
    %vm306 = vcmp.ge.f32.partialorder %v290, %v300
    %v307 = vsel %vm303, %v302, 128
    %v308 = vsel %vm304, %v302, 128
    %v309 = vsel %vm305, %v302, 128
    %v310 = vsel %vm306, %v302, 128
    %v311 = vand.u32 %v307, 65535
    %v312 = vshra.s32 %v307, 16
    %v313 = vcvt.s32.f32 %v311
    %v314 = vcvt.s32.f32 %v312
    %315 = vmin.xlane.f32.xlu0 %v314
    %v316 = vpop.xlane.xlu0 %315
    %vm317 = vcmp.eq.f32.partialorder %v314, %v316
    %v318 = vsel %vm317, %v313, inf
    %319 = vmin.xlane.f32.xlu0 %v318
    %v320 = vpop.xlane.xlu0 %319
    %v321 = vcvt.f32.s32 %v320
    %v322 = vcvt.f32.s32 %v316
    %v323 = vshll.u32 %v322, 16
    %v324 = vadd.s32 %v323, %v321
    %v325 = vand.u32 %v308, 65535
    %v326 = vshra.s32 %v308, 16
    %v327 = vcvt.s32.f32 %v325
    %v328 = vcvt.s32.f32 %v326
    %329 = vmin.xlane.f32.xlu0 %v328
    %v330 = vpop.xlane.xlu0 %329
    %vm331 = vcmp.eq.f32.partialorder %v328, %v330
    %v332 = vsel %vm331, %v327, inf
    %333 = vmin.xlane.f32.xlu0 %v332
    %v334 = vpop.xlane.xlu0 %333
    %v335 = vcvt.f32.s32 %v334
    %v336 = vcvt.f32.s32 %v330
    %v337 = vshll.u32 %v336, 16
    %v338 = vadd.s32 %v337, %v335
    %v339 = vand.u32 %v309, 65535
    %v340 = vshra.s32 %v309, 16
    %v341 = vcvt.s32.f32 %v339
    %v342 = vcvt.s32.f32 %v340
    %343 = vmin.xlane.f32.xlu0 %v342
    %v344 = vpop.xlane.xlu0 %343
    %vm345 = vcmp.eq.f32.partialorder %v342, %v344
    %v346 = vsel %vm345, %v341, inf
    %347 = vmin.xlane.f32.xlu0 %v346
    %v348 = vpop.xlane.xlu0 %347
    %v349 = vcvt.f32.s32 %v348
    %v350 = vcvt.f32.s32 %v344
    %v351 = vshll.u32 %v350, 16
    %v352 = vadd.s32 %v351, %v349
    %v353 = vand.u32 %v310, 65535
    %v354 = vshra.s32 %v310, 16
    %v355 = vcvt.s32.f32 %v353
    %v356 = vcvt.s32.f32 %v354
    %357 = vmin.xlane.f32.xlu0 %v356
    %v358 = vpop.xlane.xlu0 %357
    %vm359 = vcmp.eq.f32.partialorder %v356, %v358
    %v360 = vsel %vm359, %v355, inf
    %361 = vmin.xlane.f32.xlu0 %v360
    %v362 = vpop.xlane.xlu0 %361
    %v363 = vcvt.f32.s32 %v362
    %v364 = vcvt.f32.s32 %v358
    %v365 = vshll.u32 %v364, 16
    %v366 = vadd.s32 %v365, %v363
    %v367 = vlaneseq
    %v368 = vshrl.u32 %v367, 7
    %v369 = vsub.s32 %v302, %v368
    %v370 = vrot.slane %v324, %v369
    %v371 = vadd.s32 %v302, 4294967288
    %v372 = vlaneseq
    %v373 = vshrl.u32 %v372, 7
    %v374 = vsub.s32 %v371, %v373
    %v375 = vrot.slane %v338, %v374
    %vm376 = vcmask 130112
    %v377 = vsel %vm376, %v375, %v370
    %v378 = vlaneseq
    %v379 = vshrl.u32 %v378, 7
    %v380 = vsub.s32 %v302, %v379
    %v381 = vrot.slane %v352, %v380
    %v382 = vlaneseq
    %v383 = vshrl.u32 %v382, 7
    %v384 = vsub.s32 %v371, %v383
    %v385 = vrot.slane %v366, %v384
    %v386 = vsel %vm376, %v385, %v381
    %vm387 = vcmask 1041409
    %v388 = vsel %vm387, %v386, %v377
    %vm389 = vcmask 123904
    %390 = vst.msk [vmem:[#allocation8] sm:$0x3] %vm389, %v388
    %v391 = vsub.f32 %v275, %v294
    %v392 = vsub.f32 %v280, %v296
    %v393 = vsub.f32 %v285, %v298
    %v394 = vsub.f32 %v290, %v300
    %v395 = vmul.f32 %v391, 1.442695
    %v396 = vpow.pop %v395
    %v397 = vmul.f32 %v392, 1.442695
    %v398 = vpow.pop %v397
    %v399 = vmul.f32 %v393, 1.442695
    %v400 = vpow.pop %v399
    %v401 = vmul.f32 %v394, 1.442695
    %v402 = vpow.pop %v401
    %403 = vadd.xlane.f32.xlu0 %v396
    %v404 = vpop.xlane.xlu0 %403
    %405 = vadd.xlane.f32.xlu0 %v398
    %v406 = vpop.xlane.xlu0 %405
    %407 = vadd.xlane.f32.xlu0 %v400
    %v408 = vpop.xlane.xlu0 %407
    %409 = vadd.xlane.f32.xlu0 %v402
    %v410 = vpop.xlane.xlu0 %409
    %v415 = vlaneseq
    %v416 = vshrl.u32 %v415, 7
    %v417 = vsub.s32 %v302, %v416
    %v418 = vrot.slane %v404, %v417
    %v419 = vlaneseq
    %v420 = vshrl.u32 %v419, 7
    %v421 = vsub.s32 %v371, %v420
    %v422 = vrot.slane %v406, %v421
    %v423 = vsel %vm376, %v422, %v418
    %v424 = vlaneseq
    %v425 = vshrl.u32 %v424, 7
    %v426 = vsub.s32 %v302, %v425
    %v427 = vrot.slane %v408, %v426
    %v428 = vlaneseq
    %v429 = vshrl.u32 %v428, 7
    %v430 = vsub.s32 %v371, %v429
    %v431 = vrot.slane %v410, %v430
    %v432 = vsel %vm376, %v431, %v427
    %v433 = vsel %vm387, %v432, %v423
    %v435 = vsel %vm389, %v433, -inf
    %436 = vmax.xlane.f32.xlu0 %v435
    %v437 = vpop.xlane.xlu0 %436
    %v438 = vrcp.pop %v437
    %vm439 = vcmask 1024
    %440 = vst.msk [vmem:[%s6] sm:$0x3] %vm439, %v438
    // Predicated region
    $region34: #{tpu_custom_call.1} parent=1 // pred_check
      _
    $region35: #{tpu_custom_call.1} parent=1 // pred_check_branch
      %442 = sbr.rel (0) target = $region37
    $region36: #{tpu_custom_call.1} parent=1 // pred_region
      %s444 = ssub.s32 32, 32
      %445 = vsyncadd [#allocation4], %s444
      %s447 = sshll.u32 [#allocation8], 4
      %s448 = int_to_ptr.vmem [resolvable:$true] %s447
      %450 = dma.vmem_to_hbm [thread:$0]  %s448, 32, %s5, [#allocation4]
    $region37: #{tpu_custom_call.1} parent=1 // pred_fallthru
      _
    // Predicated region
    $region38: #{tpu_custom_call.1} parent=1 // pred_check
      _
    $region39: #{tpu_custom_call.1} parent=1 // pred_check_branch
      %452 = sbr.rel (0) target = $region41
    $region40: #{tpu_custom_call.1} parent=1 // pred_region
      _
    $region41: #{tpu_custom_call.1} parent=1 // pred_fallthru
      _
    // Predicated region
    $region42: #{tpu_custom_call.1} parent=1 // pred_check
      _
    $region43: #{tpu_custom_call.1} parent=1 // pred_check_branch
      %454 = sbr.rel (0) target = $region45
    $region44: #{tpu_custom_call.1} parent=1 // pred_region
      %455 = dma.done [#allocation4], 32
    $region45: #{tpu_custom_call.1} parent=1 // pred_fallthru
      _
    // Predicated region
    $region46: #{tpu_custom_call.1} parent=1 // pred_check
      _
    $region47: #{tpu_custom_call.1} parent=1 // pred_check_branch
      %457 = sbr.rel (0) target = $region49
    $region48: #{tpu_custom_call.1} parent=1 // pred_region
      _
    $region49: #{tpu_custom_call.1} parent=1 // pred_fallthru
      _
    %458 = vsyncpa [#allocation3], 1
    %459 = vsyncpa [#allocation6], 1
    %460 = vsyncpa [#allocation4], 1

</llo_original>
